<compile_context>
chip_gen: v5e
topology: v5e:2x2
jax: 0.10.0
libtpu: 0.0.40
codegen_flags: <defaults>
</compile_context>

<pallas_src>
import functools

import jax
import jax.numpy as jnp
from jax.experimental import pallas as pl
from jax.experimental.pallas import tpu as pltpu

OUT_CHANNELS = 8
KERNEL_SIZE = 3
N_MIN = 4
N_MAX = 16


def bilinear_kernel_resample(kernel, n, n_max):
    """Port of AdaptiveDepthConv._bilinear_kernel_resample (gather dim fixed to 0)."""
    ch, n_min, kh, kw = kernel.shape
    k = jnp.transpose(kernel, (1, 0, 2, 3))                             # (N_min, ch, kh, kw)
    k = jnp.concatenate(
        [k, jnp.zeros((n_max - n_min, ch, kh, kw), jnp.float32)], axis=0)
    flat = k.reshape(n_max, -1)                                         # (N_max, ch*kh*kw)
    xx = jnp.linspace(0.0, float(n_min - 1), n)
    xx_ = jnp.concatenate([xx, jnp.ones((n_max - n,), jnp.float32)], axis=0)
    ind0 = jnp.floor(xx_).astype(jnp.int32)
    ind1 = jnp.ceil(xx_).astype(jnp.int32)
    w0 = (xx - jnp.floor(xx)).reshape(n, 1)
    w0 = jnp.concatenate([w0, jnp.zeros((n_max - n, 1), jnp.float32)], axis=0)
    w1 = 1.0 - w0
    new = w0 * flat[ind1] + w1 * flat[ind0]
    new = new * n_min / n
    return new.reshape(n_max, ch, kh, kw)                               # (N_max, ch, kh, kw)


def _fused_conv_kernel(w_ref, b_ref, x_ref, o_ref):
    # w_ref: (C_out, K)          fused tap weights, K = T*N (resident across steps)
    # b_ref: (C_out, 1)          bias (resident), broadcast-added over lanes
    # x_ref: (K, lane_block)     im2col columns for this lane block
    # o_ref: (C_out, lane_block) lane-dense output block (unmasked 128-wide stores)
    acc = jnp.dot(w_ref[...], x_ref[...], preferred_element_type=jnp.float32)
    o_ref[...] = (acc + b_ref[...]).astype(o_ref.dtype)


@functools.partial(jax.jit, static_argnames=("n_max", "lane_block"))
def adaptive_depth_conv_pallas(x, weight, bias, n_max=N_MAX, lane_block=2048):
    """x: (B, N, H, W) NCHW; weight: (C_out, N_min, KH, KW) OIHW; bias: (C_out,)."""
    B, N, H, W = x.shape
    C_out, _, KH, KW = weight.shape
    assert 1 <= N <= n_max, f"N={N} must be in [1, {n_max}]"
    HO, WO = H - KH + 1, W - KW + 1
    T = KH * KW
    K = T * N
    P = HO * WO
    L = B * P                                     # batch folded into the lane axis

    # Lane-block size: multiple of 128, no larger than the (128-rounded) problem.
    lb = min(int(lane_block), -(-L // 128) * 128)
    lb = max(128, (lb // 128) * 128)
    L_pad = -(-L // lb) * lb
    grid = (L_pad // lb,)

    # --- parameter setup (glue): resample kernel depth N_min -> N, back to OIHW.
    rk = bilinear_kernel_resample(weight, N, n_max)                     # (N_max, C_out, kh, kw)
    w_eff = jnp.transpose(rk[:N], (1, 0, 2, 3))                         # (C_out, N, kh, kw)
    # Fused weight (C_out, T*N), tap-major / channel-minor, matching the slab rows.
    w_flat = jnp.transpose(w_eff, (0, 2, 3, 1)).reshape(C_out, K).astype(jnp.float32)
    bias_col = bias.reshape(C_out, 1).astype(jnp.float32)

    # --- fused im2col slab (T*N, B*P): rows = (tap, channel), lanes = (batch, out-pos).
    # Built once, padded once at the tail (single contiguous pad region).
    # TODO(synk): for very large H,W build the im2col inside the kernel from a raw
    # (memory_space=pl.ANY) x tile to remove the T-fold HBM amplification of this slab.
    taps = [x[:, :, i:i + HO, j:j + WO] for i in range(KH) for j in range(KW)]
    x_cols = jnp.stack(taps, axis=0)                                    # (T, B, N, HO, WO)
    x_cols = jnp.transpose(x_cols, (0, 2, 1, 3, 4)).reshape(K, L)       # (K, L)
    x_cols = jnp.pad(x_cols, ((0, 0), (0, L_pad - L))).astype(jnp.float32)

    block_bytes = 4 * (C_out * K + C_out + K * lb + C_out * lb)
    vmem_limit = int(min(96 << 20, max(8 << 20, 4 * block_bytes)))      # headroom on v7x

    out = pl.pallas_call(
        _fused_conv_kernel,
        out_shape=jax.ShapeDtypeStruct((C_out, L_pad), jnp.float32),
        grid=grid,
        in_specs=[
            pl.BlockSpec((C_out, K), lambda g: (0, 0)),   # weight: VMEM-resident
            pl.BlockSpec((C_out, 1), lambda g: (0, 0)),   # bias: VMEM-resident
            pl.BlockSpec((K, lb), lambda g: (0, g)),      # im2col lane block
        ],
        out_specs=pl.BlockSpec((C_out, lb), lambda g: (0, g)),
        compiler_params=pltpu.CompilerParams(
            dimension_semantics=("parallel",),            # 2-TC sharding on v7x
            vmem_limit_bytes=vmem_limit,
        ),
        cost_estimate=pl.CostEstimate(
            flops=2 * C_out * K * L_pad,
            bytes_accessed=4 * (C_out * K + C_out + K * L_pad + C_out * L_pad),
            transcendentals=0,
        ),
    )(w_flat, bias_col, x_cols)

    # Un-fold: drop lane padding, split (B, P) lanes, back to NCHW.
    out = out[:, :L].reshape(C_out, B, HO, WO)
    out = jnp.transpose(out, (1, 0, 2, 3))
    return out.astype(x.dtype)


if __name__ == "__main__":
    key = jax.random.PRNGKey(0)
    k1, k2, k3 = jax.random.split(key, 3)
    B, N, H, W = 2, 6, 16, 16
    x = jax.random.normal(k1, (B, N, H, W), jnp.float32)
    weight = 0.1 * jax.random.normal(
        k2, (OUT_CHANNELS, N_MIN, KERNEL_SIZE, KERNEL_SIZE), jnp.float32)
    bias = 0.1 * jax.random.normal(k3, (OUT_CHANNELS,), jnp.float32)

    out = adaptive_depth_conv_pallas(x, weight, bias)
    out = jax.block_until_ready(out)

    # Reference check: XLA conv with the same resampled weight + bias.
    rk = bilinear_kernel_resample(weight, N, N_MAX)
    w_eff = jnp.transpose(rk[:N], (1, 0, 2, 3))
    ref = jax.lax.conv_general_dilated(
        x, w_eff, window_strides=(1, 1), padding="VALID",
        dimension_numbers=("NCHW", "OIHW", "NCHW")) + bias.reshape(1, -1, 1, 1)

    assert out.shape == (B, OUT_CHANNELS, H - KERNEL_SIZE + 1, W - KERNEL_SIZE + 1)
    assert jnp.allclose(out, ref, atol=1e-4, rtol=1e-4)
    print("KERNEL_OK")
</pallas_src>

<mosaic_0001>
module attributes {stable_mosaic.version = 11 : i64} {
  func.func @_fused_conv_kernel(%arg0: i32, %arg1: memref<8x54xf32, #tpu.memory_space<vmem>>, %arg2: memref<8x1xf32, #tpu.memory_space<vmem>>, %arg3: memref<54x512xf32, #tpu.memory_space<vmem>>, %arg4: memref<8x512xf32, #tpu.memory_space<vmem>>) attributes {dimension_semantics = [#tpu.dimension_semantics<parallel>], iteration_bounds = array<i64: 1>, scalar_prefetch = 0 : i64, scratch_operands = 0 : i64, tpu.core_type = #tpu.core_type<tc>, window_params = [{pipeline_mode = #tpu.pipeline_mode<synchronous>, transform_indices = @transform_0, window_bounds = array<i64: 8, 54>}, {pipeline_mode = #tpu.pipeline_mode<synchronous>, transform_indices = @transform_1, window_bounds = array<i64: 8, 1>}, {transform_indices = @transform_2, window_bounds = array<i64: 54, 512>}, {transform_indices = @transform_3, window_bounds = array<i64: 8, 512>}]} {
    %c0 = arith.constant 0 : index
    %c0_0 = arith.constant 0 : index
    %0 = vector.load %arg1[%c0, %c0_0] : memref<8x54xf32, #tpu.memory_space<vmem>>, vector<8x54xf32>
    %c0_1 = arith.constant 0 : index
    %c0_2 = arith.constant 0 : index
    %1 = vector.load %arg3[%c0_1, %c0_2] : memref<54x512xf32, #tpu.memory_space<vmem>>, vector<54x512xf32>
    %cst = arith.constant dense<0.000000e+00> : vector<8x512xf32>
    %2 = tpu.matmul %0, %1, %cst {dimension_numbers = #tpu.dot_dimension_numbers<[1], [0], [0], [1], [0, 0, 1, 1], [], []>} : vector<8x54xf32>, vector<54x512xf32>, vector<8x512xf32> -> vector<8x512xf32>
    %c0_3 = arith.constant 0 : index
    %c0_4 = arith.constant 0 : index
    %3 = vector.load %arg2[%c0_3, %c0_4] : memref<8x1xf32, #tpu.memory_space<vmem>>, vector<8x1xf32>
    %4 = vector.broadcast %3 : vector<8x1xf32> to vector<8x512xf32>
    %5 = arith.addf %2, %4 : vector<8x512xf32>
    %c0_5 = arith.constant 0 : index
    %c0_6 = arith.constant 0 : index
    %6 = vector.load %arg4[%c0_5, %c0_6] : memref<8x512xf32, #tpu.memory_space<vmem>>, vector<8x512xf32>
    tpu.vector_store %arg4[%c0_5, %c0_6], %5 {strides = array<i32>} : memref<8x512xf32, #tpu.memory_space<vmem>>, vector<8x512xf32>,
    return
  }
  func.func @transform_0(%arg0: i32) -> (i32, i32) {
    %c0_i32 = arith.constant 0 : i32
    %c0_i32_0 = arith.constant 0 : i32
    %c0_i32_1 = arith.constant 0 : i32
    return %c0_i32, %c0_i32_0 : i32, i32
  }
  func.func @transform_1(%arg0: i32) -> (i32, i32) {
    %c0_i32 = arith.constant 0 : i32
    %c0_i32_0 = arith.constant 0 : i32
    %c0_i32_1 = arith.constant 0 : i32
    return %c0_i32, %c0_i32_0 : i32, i32
  }
  func.func @transform_2(%arg0: i32) -> (i32, i32) {
    %c0_i32 = arith.constant 0 : i32
    %c0_i32_0 = arith.constant 0 : i32
    return %c0_i32, %arg0 : i32, i32
  }
  func.func @transform_3(%arg0: i32) -> (i32, i32) {
    %c0_i32 = arith.constant 0 : i32
    %c0_i32_0 = arith.constant 0 : i32
    return %c0_i32, %arg0 : i32, i32
  }
}

</mosaic_0001>

<llo_original>
// kernel: adaptive_depth_conv_pallas.1
$region0: #{adaptive_depth_conv_pallas.1}
  #allocation0 [shape = 'u32[]', space=smem, size = 0x4, offset = 0x4, fixed_abs, tag = 'smem constant byte address 0x4 - core index']
  #allocation1 [shape = 'u32[72,128]{1,0:T(1,128)}', space=vmem, size = 0x9000, scoped, tag = 'internal scratch']
  %s0 = inlined_call_operand.vmem [shape: f32[8,54], index: 0, kind: input, shape index: {}]
  %s1 = inlined_call_operand.vmem [shape: f32[8,1], index: 1, kind: input, shape index: {}]
  %s2 = inlined_call_operand.vmem [shape: f32[54,512], index: 2, kind: input, shape index: {}]
  %s3 = inlined_call_operand.vmem [shape: f32[8,512], index: 3, kind: output, shape index: {}]
  %s4 = sld [smem:[#allocation0]]
  $region22: #{adaptive_depth_conv_pallas.1} parent=0
    _
  %s6 = ssub.s32 1, %s4
  %s7 = scalar_select 0, %s6, %s4
  // Predicated region
  $region2: #{adaptive_depth_conv_pallas.1} parent=0 // pred_check
    _
  $region3: #{adaptive_depth_conv_pallas.1} parent=0 // pred_check_branch
    %9 = sbr.rel (0) target = $region5
  $region4: #{adaptive_depth_conv_pallas.1} parent=0 // pred_region
    _
  $region5: #{adaptive_depth_conv_pallas.1} parent=0 // pred_fallthru
    _
  // Predicated region
  $region6: #{adaptive_depth_conv_pallas.1} parent=0 // pred_check
    _
  $region7: #{adaptive_depth_conv_pallas.1} parent=0 // pred_check_branch
    %11 = sbr.rel (0) target = $region9
  $region8: #{adaptive_depth_conv_pallas.1} parent=0 // pred_region
    _
  $region9: #{adaptive_depth_conv_pallas.1} parent=0 // pred_fallthru
    _
  // Predicated region
  $region10: #{adaptive_depth_conv_pallas.1} parent=0 // pred_check
    _
  $region11: #{adaptive_depth_conv_pallas.1} parent=0 // pred_check_branch
    %13 = sbr.rel (0) target = $region13
  $region12: #{adaptive_depth_conv_pallas.1} parent=0 // pred_region
    _
  $region13: #{adaptive_depth_conv_pallas.1} parent=0 // pred_fallthru
    _
  %v14 = vld [vmem:[%s0] sm:$0xff]
  %v15 = vld [vmem:[%s2] sm:$0xff]
  %v16 = vld [vmem:[%s2 + $0x8] sm:$0xff]
  %v17 = vld [vmem:[%s2 + $0x10] sm:$0xff]
  %v18 = vld [vmem:[%s2 + $0x18] sm:$0xff]
  %v19 = vld [vmem:[%s2 + $0x20] sm:$0xff]
  %v20 = vld [vmem:[%s2 + $0x28] sm:$0xff]
  %v21 = vld [vmem:[%s2 + $0x30] sm:$0xff]
  %v22 = vld [vmem:[%s2 + $0x38] sm:$0xff]
  %v23 = vld [vmem:[%s2 + $0x40] sm:$0xff]
  %v24 = vld [vmem:[%s2 + $0x48] sm:$0xff]
  %v25 = vld [vmem:[%s2 + $0x50] sm:$0xff]
  %v26 = vld [vmem:[%s2 + $0x58] sm:$0xff]
  %v27 = vld [vmem:[%s2 + $0x60] sm:$0xff]
  %v28 = vld [vmem:[%s2 + $0x68] sm:$0xff]
  %v29 = vld [vmem:[%s2 + $0x70] sm:$0xff]
  %v30 = vld [vmem:[%s2 + $0x78] sm:$0xff]
  %v31 = vld [vmem:[%s2 + $0x80] sm:$0xff]
  %v32 = vld [vmem:[%s2 + $0x88] sm:$0xff]
  %v33 = vld [vmem:[%s2 + $0x90] sm:$0xff]
  %v34 = vld [vmem:[%s2 + $0x98] sm:$0xff]
  %v35 = vld [vmem:[%s2 + $0xa0] sm:$0xff]
  %v36 = vld [vmem:[%s2 + $0xa8] sm:$0xff]
  %v37 = vld [vmem:[%s2 + $0xb0] sm:$0xff]
  %v38 = vld [vmem:[%s2 + $0xb8] sm:$0xff]
  %v39 = vld [vmem:[%s2 + $0xc0] sm:$0x3f]
  %v40 = vld [vmem:[%s2 + $0xc8] sm:$0x3f]
  %v41 = vld [vmem:[%s2 + $0xd0] sm:$0x3f]
  %v42 = vld [vmem:[%s2 + $0xd8] sm:$0x3f]
  %v43 = vld [vmem:[%s1] sm:$0xff]
  %45 = vset.pattern.permute.xlu0 0
  %46 = vperm.xlu0 %45, %v43
  %v47 = vpop.permute.xlu0 %46
  %vm49 = vcmask 441344
  %v51 = vsel %vm49, %v14, 0
  %vm53 = vcmask 1045504
  %v55 = vsel %vm53, %v39, 0
  %v58 = vsel %vm53, %v40, 0
  %v61 = vsel %vm53, %v41, 0
  %v64 = vsel %vm53, %v42, 0
  %66 = vmatpush.msra.mxu0 0.0
  %67 = vmatpush.msra.mxu0 0.0
  %68 = vmatpush.msra.mxu0 0.0
  %69 = vmatpush.msra.mxu0 0.0
  %70 = vmatpush.msra.mxu0 0.0
  %71 = vmatpush.msra.mxu0 0.0
  %72 = vmatpush.msra.mxu0 0.0
  %73 = vmatpush.msra.mxu0 0.0
  %74 = vmatpush.msra.mxu0 0.0
  %75 = vmatpush.msra.mxu0 %v55
  %76 = vmatpush.msra.mxu0 %v35
  %77 = vmatpush.msra.mxu0 %v31
  %78 = vmatpush.msra.mxu0 %v27
  %79 = vmatpush.msra.mxu0 %v23
  %80 = vmatpush.msra.mxu0 %v19
  %81 = vmatpush.msra.mxu0 %v15
  %82 = vmatmul.f32.gmra.mxu0 %v51
  %v83 = vpop.f32.mrf.mxu0
  %v84 = vadd.f32 %v47, %v83
  %85 = vdwg.mxu0
  %86 = vmatpush.msra.mxu0 0.0
  %87 = vmatpush.msra.mxu0 0.0
  %88 = vmatpush.msra.mxu0 0.0
  %89 = vmatpush.msra.mxu0 0.0
  %90 = vmatpush.msra.mxu0 0.0
  %91 = vmatpush.msra.mxu0 0.0
  %92 = vmatpush.msra.mxu0 0.0
  %93 = vmatpush.msra.mxu0 0.0
  %94 = vmatpush.msra.mxu0 0.0
  %95 = vmatpush.msra.mxu0 %v58
  %96 = vmatpush.msra.mxu0 %v36
  %97 = vmatpush.msra.mxu0 %v32
  %98 = vmatpush.msra.mxu0 %v28
  %99 = vmatpush.msra.mxu0 %v24
  %100 = vmatpush.msra.mxu0 %v20
  %101 = vmatpush.msra.mxu0 %v16
  %102 = vmatmul.f32.gmra.mxu0 %v51
  %v103 = vpop.f32.mrf.mxu0
  %v104 = vadd.f32 %v47, %v103
  %105 = vdwg.mxu0
  %106 = vmatpush.msra.mxu0 0.0
  %107 = vmatpush.msra.mxu0 0.0
  %108 = vmatpush.msra.mxu0 0.0
  %109 = vmatpush.msra.mxu0 0.0
  %110 = vmatpush.msra.mxu0 0.0
  %111 = vmatpush.msra.mxu0 0.0
  %112 = vmatpush.msra.mxu0 0.0
  %113 = vmatpush.msra.mxu0 0.0
  %114 = vmatpush.msra.mxu0 0.0
  %115 = vmatpush.msra.mxu0 %v61
  %116 = vmatpush.msra.mxu0 %v37
  %117 = vmatpush.msra.mxu0 %v33
  %118 = vmatpush.msra.mxu0 %v29
  %119 = vmatpush.msra.mxu0 %v25
  %120 = vmatpush.msra.mxu0 %v21
  %121 = vmatpush.msra.mxu0 %v17
  %122 = vmatmul.f32.gmra.mxu0 %v51
  %v123 = vpop.f32.mrf.mxu0
  %v124 = vadd.f32 %v47, %v123
  %125 = vdwg.mxu0
  %126 = vmatpush.msra.mxu0 0.0
  %127 = vmatpush.msra.mxu0 0.0
  %128 = vmatpush.msra.mxu0 0.0
  %129 = vmatpush.msra.mxu0 0.0
  %130 = vmatpush.msra.mxu0 0.0
  %131 = vmatpush.msra.mxu0 0.0
  %132 = vmatpush.msra.mxu0 0.0
  %133 = vmatpush.msra.mxu0 0.0
  %134 = vmatpush.msra.mxu0 0.0
  %135 = vmatpush.msra.mxu0 %v64
  %136 = vmatpush.msra.mxu0 %v38
  %137 = vmatpush.msra.mxu0 %v34
  %138 = vmatpush.msra.mxu0 %v30
  %139 = vmatpush.msra.mxu0 %v26
  %140 = vmatpush.msra.mxu0 %v22
  %141 = vmatpush.msra.mxu0 %v18
  %142 = vmatmul.f32.gmra.mxu0 %v51
  %v143 = vpop.f32.mrf.mxu0
  %v144 = vadd.f32 %v47, %v143
  %145 = vdwg.mxu0
  %146 = vst [vmem:[%s3] sm:$0xff] %v84
  %147 = vst [vmem:[%s3 + $0x8] sm:$0xff] %v104
  %148 = vst [vmem:[%s3 + $0x10] sm:$0xff] %v124
  %149 = vst [vmem:[%s3 + $0x18] sm:$0xff] %v144
  // Predicated region
  $region14: #{adaptive_depth_conv_pallas.1} parent=0 // pred_check
    _
  $region15: #{adaptive_depth_conv_pallas.1} parent=0 // pred_check_branch
    %151 = sbr.rel (0) target = $region17
  $region16: #{adaptive_depth_conv_pallas.1} parent=0 // pred_region
    _
  $region17: #{adaptive_depth_conv_pallas.1} parent=0 // pred_fallthru
    _
  // Predicated region
  $region18: #{adaptive_depth_conv_pallas.1} parent=0 // pred_check
    _
  $region19: #{adaptive_depth_conv_pallas.1} parent=0 // pred_check_branch
    %153 = sbr.rel (0) target = $region21
  $region20: #{adaptive_depth_conv_pallas.1} parent=0 // pred_region
    _
  $region21: #{adaptive_depth_conv_pallas.1} parent=0 // pred_fallthru
    _

</llo_original>
